<compile_context>
chip_gen: v7x
topology: tpu7x:2x2x1
jax: 0.10.0
libtpu: 0.0.40
codegen_flags: <defaults>
</compile_context>

<pallas_src>
import functools

import jax
import jax.numpy as jnp
from jax.experimental import pallas as pl
from jax.experimental.pallas import tpu as pltpu


# -----------------------------------------------------------------------------
# Fused single-pass kernel: (NB, C, HW) block (NB whole images) per grid step.
# -----------------------------------------------------------------------------
def _ca_fused_kernel(x_ref, w1t_ref, b1_ref, w2_ref, b2_ref, o_ref, *, inv_hw):
    x = x_ref[...]                                                        # (NB, C, HW)

    # Global average pool: lane reduction, f32 accumulation, no full f32 copy.
    y = jnp.sum(x, axis=-1, keepdims=True, dtype=jnp.float32) * inv_hw    # (NB, C, 1)

    # Tiny FC path on the VPU/XLU:
    #   h = relu(W1 @ y + b1)    s = sigmoid(W2 @ h + b2)
    w1t = w1t_ref[...]                                                    # (C, C8)
    w2 = w2_ref[...]                                                      # (C, C8)
    h = jnp.sum(w1t[None, :, :] * y, axis=1, keepdims=True) + b1_ref[...]  # (NB, 1, C8)
    h = jnp.maximum(h, 0.0)
    s = jnp.sum(w2[None, :, :] * h, axis=2, keepdims=True) + b2_ref[...]   # (NB, C, 1)
    s = jax.nn.sigmoid(s)

    # Per-channel (sublane) scale broadcast over HW (lanes), in native dtype.
    o_ref[...] = (x * s.astype(x.dtype)).astype(o_ref.dtype)


# -----------------------------------------------------------------------------
# Tiled path, pass 1: pooled mean over HW tiles -> FC -> sigmoid scale (N, C, 1)
# Grid: (N, n_hw); the HW axis is a reduction ("arbitrary"), accumulated
# directly in the resident output block.
# -----------------------------------------------------------------------------
def _ca_pool_fc_kernel(x_ref, w1t_ref, b1_ref, w2_ref, b2_ref, s_ref, *, inv_hw):
    hw_step = pl.program_id(1)

    @pl.when(hw_step == 0)
    def _():
        s_ref[...] = jnp.zeros_like(s_ref)

    x = x_ref[0]                                                          # (C, THW)
    s_ref[0] += jnp.sum(x, axis=-1, keepdims=True, dtype=jnp.float32)     # partial sum

    @pl.when(hw_step == pl.num_programs(1) - 1)
    def _():
        y = s_ref[0] * inv_hw                                             # (C, 1) mean
        h = jnp.sum(w1t_ref[...] * y, axis=0, keepdims=True) + b1_ref[...]
        h = jnp.maximum(h, 0.0)
        s = jnp.sum(w2_ref[...] * h, axis=1, keepdims=True) + b2_ref[...]
        s_ref[0] = jax.nn.sigmoid(s)


# -----------------------------------------------------------------------------
# Tiled path, pass 2: lane-dense per-channel scale of each HW tile.
# -----------------------------------------------------------------------------
def _ca_scale_kernel(s_ref, x_ref, o_ref):
    s = s_ref[0]                                                          # (C, 1), f32
    x = x_ref[0]                                                          # (C, THW)
    o_ref[0] = (x * s.astype(x.dtype)).astype(o_ref.dtype)


def _pick_hw_tile(hw, c, itemsize, target_bytes):
    """Largest multiple-of-128 divisor of `hw` whose (c, tile) block fits the budget."""
    max_thw = max(1, target_bytes // (c * itemsize))
    if hw <= max_thw:
        return hw
    best = None
    t = 128
    while t <= hw:
        if hw % t == 0 and t <= max_thw:
            best = t
        t += 128
    return best if best is not None else hw  # fall back to full extent


def _pick_batch_block(n, per_image_bytes, target_bytes):
    """Largest divisor of `n` whose packed block fits the budget (>= 1)."""
    nb = 1
    for cand in range(1, n + 1):
        if n % cand == 0 and cand * per_image_bytes <= target_bytes:
            nb = cand
    return nb


def ca_layer_pallas(x_nchw, w1, b1, w2, b2, *, max_block_bytes=4 * 1024 * 1024):
    """x_nchw: (N, C, H, W); w1: (C//8, C); b1: (C//8,); w2: (C, C//8); b2: (C,)."""
    N, C, H, W = x_nchw.shape
    C8 = w1.shape[0]
    HW = H * W
    itemsize = x_nchw.dtype.itemsize

    # Native layout: (N, C, H*W) -- pure reshape, no transpose glue.
    x_k = x_nchw.reshape(N, C, HW)
    w1_t = w1.T                     # (C, C8)
    w2_k = w2                       # (C, C8)
    b1_r = b1.reshape(1, C8)
    b2_r = b2.reshape(C, 1)
    inv_hw = 1.0 / float(HW)

    weight_specs = [
        pl.BlockSpec((C, C8), lambda *_: (0, 0)),
        pl.BlockSpec((1, C8), lambda *_: (0, 0)),
        pl.BlockSpec((C, C8), lambda *_: (0, 0)),
        pl.BlockSpec((C, 1), lambda *_: (0, 0)),
    ]
    vmem_limit = 32 * 1024 * 1024

    per_image_bytes = C * HW * itemsize
    if per_image_bytes <= max_block_bytes:
        # ---- Fused single pass; pack NB whole images per grid step. ----
        nb = _pick_batch_block(N, per_image_bytes, max_block_bytes)
        out_k = pl.pallas_call(
            functools.partial(_ca_fused_kernel, inv_hw=inv_hw),
            out_shape=jax.ShapeDtypeStruct((N, C, HW), x_nchw.dtype),
            grid_spec=pltpu.PrefetchScalarGridSpec(
                num_scalar_prefetch=0,
                grid=(N // nb,),
                in_specs=[pl.BlockSpec((nb, C, HW), lambda n: (n, 0, 0))] + weight_specs,
                out_specs=pl.BlockSpec((nb, C, HW), lambda n: (n, 0, 0)),
            ),
            compiler_params=pltpu.CompilerParams(
                dimension_semantics=("parallel",),
                vmem_limit_bytes=vmem_limit,
            ),
            cost_estimate=pl.CostEstimate(
                flops=2 * N * C * HW,
                transcendentals=N * C,
                bytes_accessed=2 * N * C * HW * itemsize,
            ),
        )(x_k, w1_t, b1_r, w2_k, b2_r)
        return out_k.reshape(N, C, H, W)

    # ---- Tiled two-pass path for images that exceed the VMEM block budget. ----
    thw = _pick_hw_tile(HW, C, itemsize, max_block_bytes)
    n_hw = HW // thw

    # Pass 1: pooled mean -> tiny FC -> per-channel sigmoid scale s, (N, C, 1) f32.
    s_k = pl.pallas_call(
        functools.partial(_ca_pool_fc_kernel, inv_hw=inv_hw),
        out_shape=jax.ShapeDtypeStruct((N, C, 1), jnp.float32),
        grid_spec=pltpu.PrefetchScalarGridSpec(
            num_scalar_prefetch=0,
            grid=(N, n_hw),
            in_specs=[pl.BlockSpec((1, C, thw), lambda n, h: (n, 0, h))] + weight_specs,
            out_specs=pl.BlockSpec((1, C, 1), lambda n, h: (n, 0, 0)),
        ),
        compiler_params=pltpu.CompilerParams(
            dimension_semantics=("parallel", "arbitrary"),
            vmem_limit_bytes=vmem_limit,
        ),
        cost_estimate=pl.CostEstimate(
            flops=N * C * HW,
            transcendentals=N * C,
            bytes_accessed=N * C * HW * itemsize,
        ),
    )(x_k, w1_t, b1_r, w2_k, b2_r)

    # Pass 2: tiled, lane-dense per-channel scale.
    out_k = pl.pallas_call(
        _ca_scale_kernel,
        out_shape=jax.ShapeDtypeStruct((N, C, HW), x_nchw.dtype),
        grid_spec=pltpu.PrefetchScalarGridSpec(
            num_scalar_prefetch=0,
            grid=(N, n_hw),
            in_specs=[
                pl.BlockSpec((1, C, 1), lambda n, h: (n, 0, 0)),
                pl.BlockSpec((1, C, thw), lambda n, h: (n, 0, h)),
            ],
            out_specs=pl.BlockSpec((1, C, thw), lambda n, h: (n, 0, h)),
        ),
        compiler_params=pltpu.CompilerParams(
            dimension_semantics=("parallel", "parallel"),
            vmem_limit_bytes=vmem_limit,
        ),
        cost_estimate=pl.CostEstimate(
            flops=N * C * HW,
            transcendentals=0,
            bytes_accessed=2 * N * C * HW * itemsize,
        ),
    )(s_k, x_k)
    return out_k.reshape(N, C, H, W)


def ca_layer_ref(x_nchw, w1, b1, w2, b2):
    """Pure-JAX reference mirroring the PyTorch module."""
    y = jnp.mean(x_nchw, axis=(2, 3))                      # (N, C)
    h = jnp.maximum(y @ w1.T + b1, 0.0)                    # (N, C//8)
    s = jax.nn.sigmoid(h @ w2.T + b2)                      # (N, C)
    return x_nchw * s[:, :, None, None]


if __name__ == "__main__":
    def _run_case(N, C, H, W, max_block_bytes):
        C8 = C // 8
        key = jax.random.PRNGKey(0)
        kx, k1, k2, k3, k4 = jax.random.split(key, 5)
        x = jax.random.normal(kx, (N, C, H, W), dtype=jnp.float32)
        w1 = jax.random.normal(k1, (C8, C), dtype=jnp.float32) * 0.1   # conv1 weight
        b1 = jax.random.normal(k2, (C8,), dtype=jnp.float32) * 0.1     # conv1 bias
        w2 = jax.random.normal(k3, (C, C8), dtype=jnp.float32) * 0.1   # conv2 weight
        b2 = jax.random.normal(k4, (C,), dtype=jnp.float32) * 0.1      # conv2 bias

        out = jax.block_until_ready(
            ca_layer_pallas(x, w1, b1, w2, b2, max_block_bytes=max_block_bytes))
        ref = ca_layer_ref(x, w1, b1, w2, b2)
        assert out.shape == (N, C, H, W)
        assert jnp.allclose(out, ref, atol=1e-5, rtol=1e-5)

    # Small images: fused single pass, both images packed into one grid step.
    _run_case(2, 32, 16, 16, max_block_bytes=4 * 1024 * 1024)
    # Budget fits one image only: fused path with one image per grid step.
    _run_case(2, 32, 16, 16, max_block_bytes=48 * 1024)
    # Tiny block budget: forces the tiled pool+FC / scale two-pass path.
    _run_case(2, 16, 32, 32, max_block_bytes=16 * 1024)

    print("KERNEL_OK")
</pallas_src>

<mosaic_0001>
module attributes {stable_mosaic.version = 11 : i64} {
  func.func @_ca_fused_kernel(%arg0: i32, %arg1: memref<2x32x256xf32, #tpu.memory_space<vmem>>, %arg2: memref<32x4xf32, #tpu.memory_space<vmem>>, %arg3: memref<1x4xf32, #tpu.memory_space<vmem>>, %arg4: memref<32x4xf32, #tpu.memory_space<vmem>>, %arg5: memref<32x1xf32, #tpu.memory_space<vmem>>, %arg6: memref<2x32x256xf32, #tpu.memory_space<vmem>>) attributes {dimension_semantics = [#tpu.dimension_semantics<parallel>], iteration_bounds = array<i64: 1>, scalar_prefetch = 0 : i64, scratch_operands = 0 : i64, tpu.core_type = #tpu.core_type<tc>, window_params = [{transform_indices = @transform_0, window_bounds = array<i64: 2, 32, 256>}, {pipeline_mode = #tpu.pipeline_mode<synchronous>, transform_indices = @transform_1, window_bounds = array<i64: 32, 4>}, {pipeline_mode = #tpu.pipeline_mode<synchronous>, transform_indices = @transform_2, window_bounds = array<i64: 1, 4>}, {pipeline_mode = #tpu.pipeline_mode<synchronous>, transform_indices = @transform_3, window_bounds = array<i64: 32, 4>}, {pipeline_mode = #tpu.pipeline_mode<synchronous>, transform_indices = @transform_4, window_bounds = array<i64: 32, 1>}, {transform_indices = @transform_5, window_bounds = array<i64: 2, 32, 256>}]} {
    %c0 = arith.constant 0 : index
    %c0_0 = arith.constant 0 : index
    %c0_1 = arith.constant 0 : index
    %0 = vector.load %arg1[%c0, %c0_0, %c0_1] : memref<2x32x256xf32, #tpu.memory_space<vmem>>, vector<2x32x256xf32>
    %cst = arith.constant dense<0.000000e+00> : vector<2x32xf32>
    %1 = vector.multi_reduction <add>, %0, %cst [2] : vector<2x32x256xf32> to vector<2x32xf32>
    %2 = vector.shape_cast %1 : vector<2x32xf32> to vector<2x32x1xf32>
    %cst_2 = arith.constant 3.906250e-03 : f32
    %3 = vector.broadcast %cst_2 : f32 to vector<2x32x1xf32>
    %4 = arith.mulf %2, %3 : vector<2x32x1xf32>
    %c0_3 = arith.constant 0 : index
    %c0_4 = arith.constant 0 : index
    %5 = vector.load %arg2[%c0_3, %c0_4] : memref<32x4xf32, #tpu.memory_space<vmem>>, vector<32x4xf32>
    %c0_5 = arith.constant 0 : index
    %c0_6 = arith.constant 0 : index
    %6 = vector.load %arg4[%c0_5, %c0_6] : memref<32x4xf32, #tpu.memory_space<vmem>>, vector<32x4xf32>
    %7 = vector.shape_cast %5 : vector<32x4xf32> to vector<1x32x4xf32>
    %8 = vector.broadcast %7 : vector<1x32x4xf32> to vector<2x32x4xf32>
    %9 = vector.broadcast %4 : vector<2x32x1xf32> to vector<2x32x4xf32>
    %10 = arith.mulf %8, %9 : vector<2x32x4xf32>
    %cst_7 = arith.constant dense<0.000000e+00> : vector<2x4xf32>
    %11 = vector.multi_reduction <add>, %10, %cst_7 [1] : vector<2x32x4xf32> to vector<2x4xf32>
    %12 = vector.shape_cast %11 : vector<2x4xf32> to vector<2x1x4xf32>
    %c0_8 = arith.constant 0 : index
    %c0_9 = arith.constant 0 : index
    %13 = vector.load %arg3[%c0_8, %c0_9] : memref<1x4xf32, #tpu.memory_space<vmem>>, vector<1x4xf32>
    %14 = vector.shape_cast %13 : vector<1x4xf32> to vector<1x1x4xf32>
    %15 = vector.broadcast %14 : vector<1x1x4xf32> to vector<2x1x4xf32>
    %16 = arith.addf %12, %15 : vector<2x1x4xf32>
    %cst_10 = arith.constant 0.000000e+00 : f32
    %17 = vector.broadcast %cst_10 : f32 to vector<2x1x4xf32>
    %18 = arith.maximumf %16, %17 : vector<2x1x4xf32>
    %19 = vector.shape_cast %6 : vector<32x4xf32> to vector<1x32x4xf32>
    %20 = vector.broadcast %19 : vector<1x32x4xf32> to vector<2x32x4xf32>
    %21 = vector.broadcast %18 : vector<2x1x4xf32> to vector<2x32x4xf32>
    %22 = arith.mulf %20, %21 : vector<2x32x4xf32>
    %cst_11 = arith.constant dense<0.000000e+00> : vector<2x32xf32>
    %23 = vector.multi_reduction <add>, %22, %cst_11 [2] : vector<2x32x4xf32> to vector<2x32xf32>
    %24 = vector.shape_cast %23 : vector<2x32xf32> to vector<2x32x1xf32>
    %c0_12 = arith.constant 0 : index
    %c0_13 = arith.constant 0 : index
    %25 = vector.load %arg5[%c0_12, %c0_13] : memref<32x1xf32, #tpu.memory_space<vmem>>, vector<32x1xf32>
    %26 = vector.shape_cast %25 : vector<32x1xf32> to vector<1x32x1xf32>
    %27 = vector.broadcast %26 : vector<1x32x1xf32> to vector<2x32x1xf32>
    %28 = arith.addf %24, %27 : vector<2x32x1xf32>
    %29 = arith.negf %28 : vector<2x32x1xf32>
    %30 = math.exp %29 : vector<2x32x1xf32>
    %cst_14 = arith.constant 1.000000e+00 : f32
    %31 = vector.broadcast %cst_14 : f32 to vector<2x32x1xf32>
    %32 = arith.addf %31, %30 : vector<2x32x1xf32>
    %33 = arith.divf %31, %32 : vector<2x32x1xf32>
    %34 = vector.broadcast %33 : vector<2x32x1xf32> to vector<2x32x256xf32>
    %35 = arith.mulf %0, %34 : vector<2x32x256xf32>
    %c0_15 = arith.constant 0 : index
    %c0_16 = arith.constant 0 : index
    %c0_17 = arith.constant 0 : index
    %36 = vector.load %arg6[%c0_15, %c0_16, %c0_17] : memref<2x32x256xf32, #tpu.memory_space<vmem>>, vector<2x32x256xf32>
    tpu.vector_store %arg6[%c0_15, %c0_16, %c0_17], %35 {strides = array<i32>} : memref<2x32x256xf32, #tpu.memory_space<vmem>>, vector<2x32x256xf32>,
    return
  }
  func.func @transform_0(%arg0: i32) -> (i32, i32, i32) {
    %c0_i32 = arith.constant 0 : i32
    %c0_i32_0 = arith.constant 0 : i32
    %c0_i32_1 = arith.constant 0 : i32
    return %arg0, %c0_i32, %c0_i32_0 : i32, i32, i32
  }
  func.func @transform_1(%arg0: i32) -> (i32, i32) {
    %c0_i32 = arith.constant 0 : i32
    %c0_i32_0 = arith.constant 0 : i32
    %c0_i32_1 = arith.constant 0 : i32
    return %c0_i32, %c0_i32_0 : i32, i32
  }
  func.func @transform_2(%arg0: i32) -> (i32, i32) {
    %c0_i32 = arith.constant 0 : i32
    %c0_i32_0 = arith.constant 0 : i32
    %c0_i32_1 = arith.constant 0 : i32
    return %c0_i32, %c0_i32_0 : i32, i32
  }
  func.func @transform_3(%arg0: i32) -> (i32, i32) {
    %c0_i32 = arith.constant 0 : i32
    %c0_i32_0 = arith.constant 0 : i32
    %c0_i32_1 = arith.constant 0 : i32
    return %c0_i32, %c0_i32_0 : i32, i32
  }
  func.func @transform_4(%arg0: i32) -> (i32, i32) {
    %c0_i32 = arith.constant 0 : i32
    %c0_i32_0 = arith.constant 0 : i32
    %c0_i32_1 = arith.constant 0 : i32
    return %c0_i32, %c0_i32_0 : i32, i32
  }
  func.func @transform_5(%arg0: i32) -> (i32, i32, i32) {
    %c0_i32 = arith.constant 0 : i32
    %c0_i32_0 = arith.constant 0 : i32
    %c0_i32_1 = arith.constant 0 : i32
    return %arg0, %c0_i32, %c0_i32_0 : i32, i32, i32
  }
}

</mosaic_0001>

<llo_original>
// kernel: tpu_custom_call.1
$region0: #{tpu_custom_call.1}
  #allocation0 [shape = 'u32[]', space=smem, size = 0x4, offset = 0x4, fixed_abs, tag = 'smem constant byte address 0x4 - core index']
  #allocation1 [shape = 'u32[144,128]{1,0:T(1,128)}', space=vmem, size = 0x12000, scoped, tag = 'internal scratch']
  %s0 = inlined_call_operand.hbm [shape: f32[2,32,256], index: 0, kind: input, shape index: {}]
  %s1 = inlined_call_operand.vmem [shape: f32[32,4], index: 1, kind: input, shape index: {}]
  %s2 = inlined_call_operand.vmem [shape: f32[1,4], index: 2, kind: input, shape index: {}]
  %s3 = inlined_call_operand.vmem [shape: f32[32,4], index: 3, kind: input, shape index: {}]
  %s4 = inlined_call_operand.vmem [shape: f32[32,1], index: 4, kind: input, shape index: {}]
  %s5 = inlined_call_operand.hbm [shape: f32[2,32,256], index: 5, kind: output, shape index: {}]
  %s6 = sld [smem:[#allocation0]]
  $region34: #{tpu_custom_call.1} parent=0
    _
  %s8 = ssub.s32 1, %s6
  %s9 = scalar_select 0, %s8, %s6
  $region1: #{tpu_custom_call.1} parent=0
    #allocation2 [shape = 'u8[65536]{0}', space=vmem, size = 0x10000, scoped, tag = 'input window, operand 0, single buffered']
    #allocation3 [shape = 's32[1]{0}', space=sflag, size = 0x4, scoped, tag = 'scoped memory for tpu_custom_call.1']
    #allocation4 [shape = 's32[1]{0}', space=sflag, size = 0x4, scoped, tag = 'scoped memory for tpu_custom_call.1']
    #allocation5 [shape = 'u8[65536]{0}', space=vmem, size = 0x10000, scoped, tag = 'output window, operand 0, single buffered']
    %10 = vsyncpa [#allocation3], 0
    %11 = vsyncpa [#allocation4], 0
    // Predicated region
    $region2: #{tpu_custom_call.1} parent=1 // pred_check
      _
    $region3: #{tpu_custom_call.1} parent=1 // pred_check_branch
      %13 = sbr.rel (0) target = $region5
    $region4: #{tpu_custom_call.1} parent=1 // pred_region
      %s15 = ssub.s32 2048, 2048
      %16 = vsyncadd [#allocation3], %s15
      %s17 = sshll.u32 [#allocation2], 4
      %s18 = int_to_ptr.vmem [resolvable:$true] %s17
      %23 = dma.hbm_to_vmem [thread:$0]  %s0, 2048, %s18, [#allocation3], 256, 256, 16
    $region5: #{tpu_custom_call.1} parent=1 // pred_fallthru
      _
    // Predicated region
    $region6: #{tpu_custom_call.1} parent=1 // pred_check
      _
    $region7: #{tpu_custom_call.1} parent=1 // pred_check_branch
      %25 = sbr.rel (0) target = $region9
    $region8: #{tpu_custom_call.1} parent=1 // pred_region
      _
    $region9: #{tpu_custom_call.1} parent=1 // pred_fallthru
      _
    // Predicated region
    $region10: #{tpu_custom_call.1} parent=1 // pred_check
      _
    $region11: #{tpu_custom_call.1} parent=1 // pred_check_branch
      %27 = sbr.rel (0) target = $region13
    $region12: #{tpu_custom_call.1} parent=1 // pred_region
      _
    $region13: #{tpu_custom_call.1} parent=1 // pred_fallthru
      _
    // Predicated region
    $region14: #{tpu_custom_call.1} parent=1 // pred_check
      _
    $region15: #{tpu_custom_call.1} parent=1 // pred_check_branch
      %29 = sbr.rel (0) target = $region17
    $region16: #{tpu_custom_call.1} parent=1 // pred_region
      _
    $region17: #{tpu_custom_call.1} parent=1 // pred_fallthru
      _
    // Predicated region
    $region18: #{tpu_custom_call.1} parent=1 // pred_check
      _
    $region19: #{tpu_custom_call.1} parent=1 // pred_check_branch
      %31 = sbr.rel (0) target = $region21
    $region20: #{tpu_custom_call.1} parent=1 // pred_region
      _
    $region21: #{tpu_custom_call.1} parent=1 // pred_fallthru
      _
    // Predicated region
    $region22: #{tpu_custom_call.1} parent=1 // pred_check
      _
    $region23: #{tpu_custom_call.1} parent=1 // pred_check_branch
      %33 = sbr.rel (0) target = $region25
    $region24: #{tpu_custom_call.1} parent=1 // pred_region
      %34 = dma.done [#allocation3], 2048
    $region25: #{tpu_custom_call.1} parent=1 // pred_fallthru
      _
    %v35 = vld [vmem:[#allocation2] sm:$0xff]
    %v36 = vld [vmem:[#allocation2 + $0x8] sm:$0xff]
    %v37 = vld [vmem:[#allocation2 + $0x10] sm:$0xff]
    %v38 = vld [vmem:[#allocation2 + $0x18] sm:$0xff]
    %v39 = vld [vmem:[#allocation2 + $0x20] sm:$0xff]
    %v40 = vld [vmem:[#allocation2 + $0x28] sm:$0xff]
    %v41 = vld [vmem:[#allocation2 + $0x30] sm:$0xff]
    %v42 = vld [vmem:[#allocation2 + $0x38] sm:$0xff]
    %v43 = vld [vmem:[#allocation2 + $0x40] sm:$0xff]
    %v44 = vld [vmem:[#allocation2 + $0x48] sm:$0xff]
    %v45 = vld [vmem:[#allocation2 + $0x50] sm:$0xff]
    %v46 = vld [vmem:[#allocation2 + $0x58] sm:$0xff]
    %v47 = vld [vmem:[#allocation2 + $0x60] sm:$0xff]
    %v48 = vld [vmem:[#allocation2 + $0x68] sm:$0xff]
    %v49 = vld [vmem:[#allocation2 + $0x70] sm:$0xff]
    %v50 = vld [vmem:[#allocation2 + $0x78] sm:$0xff]
    %v51 = vadd.f32 %v35, %v36
    %52 = vadd.xlane.f32.xlu0 %v51
    %v53 = vpop.xlane.xlu0 %52
    %v54 = vadd.f32 %v37, %v38
    %55 = vadd.xlane.f32.xlu0 %v54
    %v56 = vpop.xlane.xlu0 %55
    %v57 = vadd.f32 %v39, %v40
    %58 = vadd.xlane.f32.xlu0 %v57
    %v59 = vpop.xlane.xlu0 %58
    %v60 = vadd.f32 %v41, %v42
    %61 = vadd.xlane.f32.xlu0 %v60
    %v62 = vpop.xlane.xlu0 %61
    %v63 = vadd.f32 %v43, %v44
    %64 = vadd.xlane.f32.xlu0 %v63
    %v65 = vpop.xlane.xlu0 %64
    %v66 = vadd.f32 %v45, %v46
    %67 = vadd.xlane.f32.xlu0 %v66
    %v68 = vpop.xlane.xlu0 %67
    %v69 = vadd.f32 %v47, %v48
    %70 = vadd.xlane.f32.xlu0 %v69
    %v71 = vpop.xlane.xlu0 %70
    %v72 = vadd.f32 %v49, %v50
    %73 = vadd.xlane.f32.xlu0 %v72
    %v74 = vpop.xlane.xlu0 %73
    %v75 = vmul.f32 %v53, 0.00390625
    %v76 = vmul.f32 %v56, 0.00390625
    %v77 = vmul.f32 %v59, 0.00390625
    %v78 = vmul.f32 %v62, 0.00390625
    %v79 = vmul.f32 %v65, 0.00390625
    %v80 = vmul.f32 %v68, 0.00390625
    %v81 = vmul.f32 %v71, 0.00390625
    %v82 = vmul.f32 %v74, 0.00390625
    %v83 = vld [vmem:[%s1] sm:$0xff]
    %v84 = vld [vmem:[%s1 + $0x8] sm:$0xff]
    %v85 = vld [vmem:[%s1 + $0x10] sm:$0xff]
    %v86 = vld [vmem:[%s1 + $0x18] sm:$0xff]
    %v87 = vld [vmem:[%s3] sm:$0xff]
    %v88 = vld [vmem:[%s3 + $0x8] sm:$0xff]
    %v89 = vld [vmem:[%s3 + $0x10] sm:$0xff]
    %v90 = vld [vmem:[%s3 + $0x18] sm:$0xff]
    %v91 = vmul.f32 %v83, %v75
    %v92 = vmul.f32 %v84, %v76
    %v93 = vmul.f32 %v85, %v77
    %v94 = vmul.f32 %v86, %v78
    %v95 = vmul.f32 %v83, %v79
    %v96 = vmul.f32 %v84, %v80
    %v97 = vmul.f32 %v85, %v81
    %v98 = vmul.f32 %v86, %v82
    %vm99 = vcmask 31744
    %v100 = vsel %vm99, %v91, 0.0
    %v101 = vsel %vm99, %v92, 0.0
    %v102 = vadd.f32 %v100, %v101
    %v103 = vsel %vm99, %v93, 0.0
    %v104 = vadd.f32 %v102, %v103
    %v105 = vsel %vm99, %v94, 0.0
    %v106 = vadd.f32 %v104, %v105
    %v107 = vrot.slane %v106, 4
    %v108 = vadd.f32 %v106, %v107
    %v109 = vrot.slane %v108, 2
    %v110 = vadd.f32 %v108, %v109
    %v111 = vrot.slane %v110, 1
    %v112 = vadd.f32 %v110, %v111
    %v113 = vsel %vm99, %v95, 0.0
    %v114 = vsel %vm99, %v96, 0.0
    %v115 = vadd.f32 %v113, %v114
    %v116 = vsel %vm99, %v97, 0.0
    %v117 = vadd.f32 %v115, %v116
    %v118 = vsel %vm99, %v98, 0.0
    %v119 = vadd.f32 %v117, %v118
    %v120 = vrot.slane %v119, 4
    %v121 = vadd.f32 %v119, %v120
    %v122 = vrot.slane %v121, 2
    %v123 = vadd.f32 %v121, %v122
    %v124 = vrot.slane %v123, 1
    %v125 = vadd.f32 %v123, %v124
    %v126 = vld [vmem:[%s2] sm:$0x1]
    %v127 = vadd.f32 %v112, %v126
    %v128 = vadd.f32 %v125, %v126
    %v129 = vmax.f32 %v127, 0.0
    %v130 = vmax.f32 %v128, 0.0
    %v131 = vlaneseq
    %v132 = vshrl.u32 %v131, 7
    %v133 = vsub.s32 0, %v132
    %v134 = vrot.slane %v129, %v133
    %v135 = vlaneseq
    %v136 = vshrl.u32 %v135, 7
    %v137 = vsub.s32 0, %v136
    %v138 = vrot.slane %v130, %v137
    %v139 = vmul.f32 %v87, %v134
    %v140 = vmul.f32 %v88, %v134
    %v141 = vmul.f32 %v89, %v134
    %v142 = vmul.f32 %v90, %v134
    %v143 = vmul.f32 %v87, %v138
    %v144 = vmul.f32 %v88, %v138
    %v145 = vmul.f32 %v89, %v138
    %v146 = vmul.f32 %v90, %v138
    %v147 = vsel %vm99, %v139, 0.0
    %148 = vadd.xlane.f32.xlu0 %v147
    %v149 = vpop.xlane.xlu0 %148
    %v150 = vsel %vm99, %v140, 0.0
    %151 = vadd.xlane.f32.xlu0 %v150
    %v152 = vpop.xlane.xlu0 %151
    %v153 = vsel %vm99, %v141, 0.0
    %154 = vadd.xlane.f32.xlu0 %v153
    %v155 = vpop.xlane.xlu0 %154
    %v156 = vsel %vm99, %v142, 0.0
    %157 = vadd.xlane.f32.xlu0 %v156
    %v158 = vpop.xlane.xlu0 %157
    %v159 = vsel %vm99, %v143, 0.0
    %160 = vadd.xlane.f32.xlu0 %v159
    %v161 = vpop.xlane.xlu0 %160
    %v162 = vsel %vm99, %v144, 0.0
    %163 = vadd.xlane.f32.xlu0 %v162
    %v164 = vpop.xlane.xlu0 %163
    %v165 = vsel %vm99, %v145, 0.0
    %166 = vadd.xlane.f32.xlu0 %v165
    %v167 = vpop.xlane.xlu0 %166
    %v168 = vsel %vm99, %v146, 0.0
    %169 = vadd.xlane.f32.xlu0 %v168
    %v170 = vpop.xlane.xlu0 %169
    %v171 = vld [vmem:[%s4] sm:$0xff]
    %v172 = vld [vmem:[%s4 + $0x8] sm:$0xff]
    %v173 = vld [vmem:[%s4 + $0x10] sm:$0xff]
    %v174 = vld [vmem:[%s4 + $0x18] sm:$0xff]
    %v175 = vadd.f32 %v149, %v171
    %v176 = vadd.f32 %v152, %v172
    %v177 = vadd.f32 %v155, %v173
    %v178 = vadd.f32 %v158, %v174
    %v179 = vadd.f32 %v161, %v171
    %v180 = vadd.f32 %v164, %v172
    %v181 = vadd.f32 %v167, %v173
    %v182 = vadd.f32 %v170, %v174
    %v183 = vxor.u32 %v175, 2147483648
    %v184 = vxor.u32 %v176, 2147483648
    %v185 = vxor.u32 %v177, 2147483648
    %v186 = vxor.u32 %v178, 2147483648
    %v187 = vxor.u32 %v179, 2147483648
    %v188 = vxor.u32 %v180, 2147483648
    %v189 = vxor.u32 %v181, 2147483648
    %v190 = vxor.u32 %v182, 2147483648
    %v191 = vmul.f32 %v183, 1.442695
    %v192 = vpow.pop %v191
    %v193 = vmul.f32 %v184, 1.442695
    %v194 = vpow.pop %v193
    %v195 = vmul.f32 %v185, 1.442695
    %v196 = vpow.pop %v195
    %v197 = vmul.f32 %v186, 1.442695
    %v198 = vpow.pop %v197
    %v199 = vmul.f32 %v187, 1.442695
    %v200 = vpow.pop %v199
    %v201 = vmul.f32 %v188, 1.442695
    %v202 = vpow.pop %v201
    %v203 = vmul.f32 %v189, 1.442695
    %v204 = vpow.pop %v203
    %v205 = vmul.f32 %v190, 1.442695
    %v206 = vpow.pop %v205
    %v207 = vadd.f32 %v192, 1.0
    %v208 = vadd.f32 %v194, 1.0
    %v209 = vadd.f32 %v196, 1.0
    %v210 = vadd.f32 %v198, 1.0
    %v211 = vadd.f32 %v200, 1.0
    %v212 = vadd.f32 %v202, 1.0
    %v213 = vadd.f32 %v204, 1.0
    %v214 = vadd.f32 %v206, 1.0
    %v215 = vrcp.pop %v207
    %v216 = vmul.f32 1.0, %v215
    %v217 = vrcp.pop %v208
    %v218 = vmul.f32 1.0, %v217
    %v219 = vrcp.pop %v209
    %v220 = vmul.f32 1.0, %v219
    %v221 = vrcp.pop %v210
    %v222 = vmul.f32 1.0, %v221
    %v223 = vrcp.pop %v211
    %v224 = vmul.f32 1.0, %v223
    %v225 = vrcp.pop %v212
    %v226 = vmul.f32 1.0, %v225
    %v227 = vrcp.pop %v213
    %v228 = vmul.f32 1.0, %v227
    %v229 = vrcp.pop %v214
    %v230 = vmul.f32 1.0, %v229
    %232 = vset.pattern.permute.xlu0 0
    %233 = vperm.xlu0 %232, %v216
    %v234 = vpop.permute.xlu0 %233
    %237 = vset.pattern.permute.xlu0 0
    %238 = vperm.xlu0 %237, %v218
    %v239 = vpop.permute.xlu0 %238
    %242 = vset.pattern.permute.xlu0 0
    %243 = vperm.xlu0 %242, %v220
    %v244 = vpop.permute.xlu0 %243
    %247 = vset.pattern.permute.xlu0 0
    %248 = vperm.xlu0 %247, %v222
    %v249 = vpop.permute.xlu0 %248
    %252 = vset.pattern.permute.xlu0 0
    %253 = vperm.xlu0 %252, %v224
    %v254 = vpop.permute.xlu0 %253
    %257 = vset.pattern.permute.xlu0 0
    %258 = vperm.xlu0 %257, %v226
    %v259 = vpop.permute.xlu0 %258
    %262 = vset.pattern.permute.xlu0 0
    %263 = vperm.xlu0 %262, %v228
    %v264 = vpop.permute.xlu0 %263
    %267 = vset.pattern.permute.xlu0 0
    %268 = vperm.xlu0 %267, %v230
    %v269 = vpop.permute.xlu0 %268
    %v271 = vmul.f32 %v35, %v234
    %v272 = vmul.f32 %v36, %v234
    %v273 = vmul.f32 %v37, %v239
    %v274 = vmul.f32 %v38, %v239
    %v275 = vmul.f32 %v39, %v244
    %v276 = vmul.f32 %v40, %v244
    %v277 = vmul.f32 %v41, %v249
    %v278 = vmul.f32 %v42, %v249
    %v279 = vmul.f32 %v43, %v254
    %v280 = vmul.f32 %v44, %v254
    %v281 = vmul.f32 %v45, %v259
    %v282 = vmul.f32 %v46, %v259
    %v283 = vmul.f32 %v47, %v264
    %v284 = vmul.f32 %v48, %v264
    %v285 = vmul.f32 %v49, %v269
    %v286 = vmul.f32 %v50, %v269
    %287 = vst [vmem:[#allocation5] sm:$0xff] %v271
    %288 = vst [vmem:[#allocation5 + $0x8] sm:$0xff] %v272
    %289 = vst [vmem:[#allocation5 + $0x10] sm:$0xff] %v273
    %290 = vst [vmem:[#allocation5 + $0x18] sm:$0xff] %v274
    %291 = vst [vmem:[#allocation5 + $0x20] sm:$0xff] %v275
    %292 = vst [vmem:[#allocation5 + $0x28] sm:$0xff] %v276
    %293 = vst [vmem:[#allocation5 + $0x30] sm:$0xff] %v277
    %294 = vst [vmem:[#allocation5 + $0x38] sm:$0xff] %v278
    %295 = vst [vmem:[#allocation5 + $0x40] sm:$0xff] %v279
    %296 = vst [vmem:[#allocation5 + $0x48] sm:$0xff] %v280
    %297 = vst [vmem:[#allocation5 + $0x50] sm:$0xff] %v281
    %298 = vst [vmem:[#allocation5 + $0x58] sm:$0xff] %v282
    %299 = vst [vmem:[#allocation5 + $0x60] sm:$0xff] %v283
    %300 = vst [vmem:[#allocation5 + $0x68] sm:$0xff] %v284
    %301 = vst [vmem:[#allocation5 + $0x70] sm:$0xff] %v285
    %302 = vst [vmem:[#allocation5 + $0x78] sm:$0xff] %v286
    // Predicated region
    $region26: #{tpu_custom_call.1} parent=1 // pred_check
      _
    $region27: #{tpu_custom_call.1} parent=1 // pred_check_branch
      %304 = sbr.rel (0) target = $region29
    $region28: #{tpu_custom_call.1} parent=1 // pred_region
      %s306 = ssub.s32 2048, 2048
      %307 = vsyncadd [#allocation4], %s306
      %s308 = sshll.u32 [#allocation5], 4
      %s309 = int_to_ptr.vmem [resolvable:$true] %s308
      %314 = dma.vmem_to_hbm [thread:$0]  %s309, 2048, %s5, [#allocation4], 256, 256, 16
    $region29: #{tpu_custom_call.1} parent=1 // pred_fallthru
      _
    // Predicated region
    $region30: #{tpu_custom_call.1} parent=1 // pred_check
      _
    $region31: #{tpu_custom_call.1} parent=1 // pred_check_branch
      %316 = sbr.rel (0) target = $region33
    $region32: #{tpu_custom_call.1} parent=1 // pred_region
      %317 = dma.done [#allocation4], 2048
    $region33: #{tpu_custom_call.1} parent=1 // pred_fallthru
      _
    %318 = vsyncpa [#allocation3], 1
    %319 = vsyncpa [#allocation4], 1

</llo_original>
